<compile_context>
chip_gen: v7x
topology: tpu7x:2x2x1
jax: 0.10.0
libtpu: 0.0.40
codegen_flags: <defaults>
</compile_context>

<pallas_src>
import functools
import math

import jax
import jax.numpy as jnp
from jax.experimental import pallas as pl
from jax.experimental.pallas import tpu as pltpu

_SUBLANE = 8    # f32 sublane granularity (second-to-last dim)
_LANE = 128     # lane granularity (last dim) -- only used for VMEM estimates
_HAS_BUFFERED = hasattr(pl, "Buffered")


def _round_up(n: int, m: int) -> int:
    return ((n + m - 1) // m) * m


def _choose_batch_tile(batch: int) -> int:
    """Tile so the grid has >=2 steps when possible (v7x megacore), <=512 rows."""
    half = _round_up(max(-(-batch // 2), _SUBLANE), _SUBLANE)
    return min(512, half)


def _physical_vmem_bytes() -> int:
    try:
        return int(pltpu.get_tpu_info().vmem_capacity_bytes)
    except Exception:
        return 64 << 20  # conservative per-core floor (v7x)


def _make_mlp_kernel(n_hidden_layers: int):
    """Fused MLP kernel for a static number of hidden (h->h) layers."""

    def kernel(x_ref, *refs):
        # refs layout: w_in, b_in, (w_i, b_i) * n_hidden_layers, w_out, b_out, o_ref
        o_ref = refs[-1]
        p = refs[:-1]

        # linear_in + ReLU  (bias (1, H) broadcasts over the row tile)
        h = jnp.dot(x_ref[...], p[0][...],
                    preferred_element_type=jnp.float32) + p[1][...]
        h = jnp.maximum(h, 0.0)

        # hidden layers + ReLU
        idx = 2
        for _ in range(n_hidden_layers):
            h = jnp.dot(h, p[idx][...],
                        preferred_element_type=jnp.float32) + p[idx + 1][...]
            h = jnp.maximum(h, 0.0)
            idx += 2

        # linear_out (no activation)
        out = jnp.dot(h, p[idx][...],
                      preferred_element_type=jnp.float32) + p[idx + 1][...]
        o_ref[...] = out.astype(o_ref.dtype)

    return kernel


def init_params(key, input_size, output_size, hidden_size, nbr_layers):
    """Deterministic parameter init (PyTorch Linear-style uniform bounds)."""
    sizes = [(input_size, hidden_size)]
    sizes += [(hidden_size, hidden_size)] * (nbr_layers - 2)
    sizes += [(hidden_size, output_size)]

    params = []
    for (fan_in, fan_out) in sizes:
        key, kw, kb = jax.random.split(key, 3)
        bound = 1.0 / math.sqrt(fan_in)
        w = jax.random.uniform(kw, (fan_in, fan_out), jnp.float32, -bound, bound)
        b = jax.random.uniform(kb, (1, fan_out), jnp.float32, -bound, bound)
        params += [w, b]
    return params


@functools.partial(
    jax.jit,
    static_argnames=("nbr_layers", "batch_tile", "single_buffer_params",
                     "use_bf16"))
def mlp_forward(x, params, *, nbr_layers, batch_tile=None,
                single_buffer_params=True, use_bf16=False):
    B, input_size = x.shape
    hidden_size = params[0].shape[1]
    output_size = params[-1].shape[-1]
    n_hidden = nbr_layers - 2
    assert len(params) == 2 * (n_hidden + 2)

    if batch_tile is None:
        batch_tile = _choose_batch_tile(B)
    Bp = _round_up(max(B, batch_tile), batch_tile)

    # Only per-call data movement: pad the batch up to a whole number of tiles.
    compute_dtype = jnp.bfloat16 if use_bf16 else x.dtype
    x_p = jnp.pad(x, ((0, Bp - B), (0, 0))).astype(compute_dtype)
    ps = [p.astype(compute_dtype) for p in params] if use_bf16 else list(params)

    kernel = _make_mlp_kernel(n_hidden)
    single_buffer = single_buffer_params and _HAS_BUFFERED

    # x: tiled over batch. Feature dims use the full (unpadded) array extents,
    # which is legal when the block dim equals the array dim.
    in_specs = [pl.BlockSpec((batch_tile, input_size), lambda i: (i, 0))]
    for p in ps:
        if single_buffer:
            in_specs.append(pl.BlockSpec(p.shape, lambda i: (0, 0),
                                         pipeline_mode=pl.Buffered(1)))
        else:
            in_specs.append(pl.BlockSpec(p.shape, lambda i: (0, 0)))

    # Natural-width output block (masked store of 4 lanes beats writing 32x
    # more HBM bytes for a lane-padded output + an extra slice kernel).
    out_spec = pl.BlockSpec((batch_tile, output_size), lambda i: (i, 0))

    # VMEM budget from the layout-rounded footprint, capped at physical VMEM.
    def _tile_bytes(r, c, itemsize):
        return _round_up(r, _SUBLANE) * _round_up(c, _LANE) * itemsize

    itm = jnp.dtype(compute_dtype).itemsize
    bufs = 1 if single_buffer else 2
    param_bytes = sum(_tile_bytes(p.shape[0], p.shape[1], itm) for p in ps)
    io_bytes = (2 * _tile_bytes(batch_tile, input_size, itm) +
                2 * _tile_bytes(batch_tile, output_size, 4))
    act_bytes = 4 * _tile_bytes(batch_tile, max(hidden_size, output_size), 4)
    vmem_limit = 2 * (bufs * param_bytes + io_bytes + act_bytes) + (12 << 20)
    vmem_limit = int(min(vmem_limit, _physical_vmem_bytes()))

    out_p = pl.pallas_call(
        kernel,
        out_shape=jax.ShapeDtypeStruct((Bp, output_size), jnp.float32),
        grid_spec=pltpu.PrefetchScalarGridSpec(
            num_scalar_prefetch=0,
            grid=(Bp // batch_tile,),
            in_specs=in_specs,
            out_specs=out_spec,
        ),
        compiler_params=pltpu.CompilerParams(
            dimension_semantics=("parallel",),   # batch tiles shard across TCs
            vmem_limit_bytes=vmem_limit),
    )(x_p, *ps)

    # Padded batch rows hold relu(bias)-derived values; slice them off before
    # anything downstream reduces over the batch.
    return out_p[:B]


def mlp_reference(x, params, nbr_layers):
    """Pure-JAX reference of the PyTorch forward pass."""
    n_hidden = nbr_layers - 2
    h = jnp.maximum(x @ params[0] + params[1], 0.0)
    idx = 2
    for _ in range(n_hidden):
        h = jnp.maximum(h @ params[idx] + params[idx + 1], 0.0)
        idx += 2
    return h @ params[idx] + params[idx + 1]


if __name__ == "__main__":
    # Shapes consistent with the module's forward:
    #   x: (batch, input_size), hidden_size=32, output_size=4, nbr_layers=4
    # batch=200 exercises a 2-step grid (both TCs on v7x) with a ragged tile.
    batch = 200
    input_size = 16
    hidden_size = 32
    output_size = 4
    nbr_layers = 4  # => 2 hidden (hidden->hidden) layers

    key = jax.random.PRNGKey(0)
    key, kx = jax.random.split(key)
    x = jax.random.normal(kx, (batch, input_size), dtype=jnp.float32)
    params = init_params(key, input_size, output_size, hidden_size, nbr_layers)

    ref = mlp_reference(x, params, nbr_layers)

    def run(single_buffer_params):
        out = jax.block_until_ready(
            mlp_forward(x, params, nbr_layers=nbr_layers,
                        single_buffer_params=single_buffer_params))
        assert out.shape == (batch, output_size)
        assert jnp.allclose(out, ref, atol=1e-4, rtol=1e-4), "mismatch vs reference"
        return out

    try:
        out = run(True)
    except (pltpu.LoweringException, NotImplementedError, TypeError):
        # Narrow fallback: only for JAX/Mosaic versions that reject
        # single-buffered (Buffered(1)) constant-index parameter blocks.
        out = run(False)

    print("KERNEL_OK")
</pallas_src>

<mosaic_0001>
module attributes {stable_mosaic.version = 11 : i64} {
  func.func @kernel(%arg0: i32, %arg1: memref<104x16xf32, #tpu.memory_space<vmem>>, %arg2: memref<16x32xf32, #tpu.memory_space<vmem>>, %arg3: memref<1x32xf32, #tpu.memory_space<vmem>>, %arg4: memref<32x32xf32, #tpu.memory_space<vmem>>, %arg5: memref<1x32xf32, #tpu.memory_space<vmem>>, %arg6: memref<32x32xf32, #tpu.memory_space<vmem>>, %arg7: memref<1x32xf32, #tpu.memory_space<vmem>>, %arg8: memref<32x4xf32, #tpu.memory_space<vmem>>, %arg9: memref<1x4xf32, #tpu.memory_space<vmem>>, %arg10: memref<104x4xf32, #tpu.memory_space<vmem>>) attributes {dimension_semantics = [#tpu.dimension_semantics<parallel>], iteration_bounds = array<i64: 2>, scalar_prefetch = 0 : i64, scratch_operands = 0 : i64, tpu.core_type = #tpu.core_type<tc>, window_params = [{transform_indices = @transform_0, window_bounds = array<i64: 104, 16>}, {pipeline_mode = #tpu.pipeline_mode<synchronous>, transform_indices = @transform_1, window_bounds = array<i64: 16, 32>}, {pipeline_mode = #tpu.pipeline_mode<synchronous>, transform_indices = @transform_2, window_bounds = array<i64: 1, 32>}, {pipeline_mode = #tpu.pipeline_mode<synchronous>, transform_indices = @transform_3, window_bounds = array<i64: 32, 32>}, {pipeline_mode = #tpu.pipeline_mode<synchronous>, transform_indices = @transform_4, window_bounds = array<i64: 1, 32>}, {pipeline_mode = #tpu.pipeline_mode<synchronous>, transform_indices = @transform_5, window_bounds = array<i64: 32, 32>}, {pipeline_mode = #tpu.pipeline_mode<synchronous>, transform_indices = @transform_6, window_bounds = array<i64: 1, 32>}, {pipeline_mode = #tpu.pipeline_mode<synchronous>, transform_indices = @transform_7, window_bounds = array<i64: 32, 4>}, {pipeline_mode = #tpu.pipeline_mode<synchronous>, transform_indices = @transform_8, window_bounds = array<i64: 1, 4>}, {transform_indices = @transform_9, window_bounds = array<i64: 104, 4>}]} {
    %c0 = arith.constant 0 : index
    %c0_0 = arith.constant 0 : index
    %0 = vector.load %arg1[%c0, %c0_0] : memref<104x16xf32, #tpu.memory_space<vmem>>, vector<104x16xf32>
    %c0_1 = arith.constant 0 : index
    %c0_2 = arith.constant 0 : index
    %1 = vector.load %arg2[%c0_1, %c0_2] : memref<16x32xf32, #tpu.memory_space<vmem>>, vector<16x32xf32>
    %cst = arith.constant dense<0.000000e+00> : vector<104x32xf32>
    %2 = tpu.matmul %0, %1, %cst {dimension_numbers = #tpu.dot_dimension_numbers<[1], [0], [0], [1], [0, 0, 1, 1], [], []>} : vector<104x16xf32>, vector<16x32xf32>, vector<104x32xf32> -> vector<104x32xf32>
    %c0_3 = arith.constant 0 : index
    %c0_4 = arith.constant 0 : index
    %3 = vector.load %arg3[%c0_3, %c0_4] : memref<1x32xf32, #tpu.memory_space<vmem>>, vector<1x32xf32>
    %4 = vector.broadcast %3 : vector<1x32xf32> to vector<104x32xf32>
    %5 = arith.addf %2, %4 : vector<104x32xf32>
    %cst_5 = arith.constant 0.000000e+00 : f32
    %6 = vector.broadcast %cst_5 : f32 to vector<104x32xf32>
    %7 = arith.maximumf %5, %6 : vector<104x32xf32>
    %c0_6 = arith.constant 0 : index
    %c0_7 = arith.constant 0 : index
    %8 = vector.load %arg4[%c0_6, %c0_7] : memref<32x32xf32, #tpu.memory_space<vmem>>, vector<32x32xf32>
    %cst_8 = arith.constant dense<0.000000e+00> : vector<104x32xf32>
    %9 = tpu.matmul %7, %8, %cst_8 {dimension_numbers = #tpu.dot_dimension_numbers<[1], [0], [0], [1], [0, 0, 1, 1], [], []>} : vector<104x32xf32>, vector<32x32xf32>, vector<104x32xf32> -> vector<104x32xf32>
    %c0_9 = arith.constant 0 : index
    %c0_10 = arith.constant 0 : index
    %10 = vector.load %arg5[%c0_9, %c0_10] : memref<1x32xf32, #tpu.memory_space<vmem>>, vector<1x32xf32>
    %11 = vector.broadcast %10 : vector<1x32xf32> to vector<104x32xf32>
    %12 = arith.addf %9, %11 : vector<104x32xf32>
    %cst_11 = arith.constant 0.000000e+00 : f32
    %13 = vector.broadcast %cst_11 : f32 to vector<104x32xf32>
    %14 = arith.maximumf %12, %13 : vector<104x32xf32>
    %c0_12 = arith.constant 0 : index
    %c0_13 = arith.constant 0 : index
    %15 = vector.load %arg6[%c0_12, %c0_13] : memref<32x32xf32, #tpu.memory_space<vmem>>, vector<32x32xf32>
    %cst_14 = arith.constant dense<0.000000e+00> : vector<104x32xf32>
    %16 = tpu.matmul %14, %15, %cst_14 {dimension_numbers = #tpu.dot_dimension_numbers<[1], [0], [0], [1], [0, 0, 1, 1], [], []>} : vector<104x32xf32>, vector<32x32xf32>, vector<104x32xf32> -> vector<104x32xf32>
    %c0_15 = arith.constant 0 : index
    %c0_16 = arith.constant 0 : index
    %17 = vector.load %arg7[%c0_15, %c0_16] : memref<1x32xf32, #tpu.memory_space<vmem>>, vector<1x32xf32>
    %18 = vector.broadcast %17 : vector<1x32xf32> to vector<104x32xf32>
    %19 = arith.addf %16, %18 : vector<104x32xf32>
    %cst_17 = arith.constant 0.000000e+00 : f32
    %20 = vector.broadcast %cst_17 : f32 to vector<104x32xf32>
    %21 = arith.maximumf %19, %20 : vector<104x32xf32>
    %c0_18 = arith.constant 0 : index
    %c0_19 = arith.constant 0 : index
    %22 = vector.load %arg8[%c0_18, %c0_19] : memref<32x4xf32, #tpu.memory_space<vmem>>, vector<32x4xf32>
    %cst_20 = arith.constant dense<0.000000e+00> : vector<104x4xf32>
    %23 = tpu.matmul %21, %22, %cst_20 {dimension_numbers = #tpu.dot_dimension_numbers<[1], [0], [0], [1], [0, 0, 1, 1], [], []>} : vector<104x32xf32>, vector<32x4xf32>, vector<104x4xf32> -> vector<104x4xf32>
    %c0_21 = arith.constant 0 : index
    %c0_22 = arith.constant 0 : index
    %24 = vector.load %arg9[%c0_21, %c0_22] : memref<1x4xf32, #tpu.memory_space<vmem>>, vector<1x4xf32>
    %25 = vector.broadcast %24 : vector<1x4xf32> to vector<104x4xf32>
    %26 = arith.addf %23, %25 : vector<104x4xf32>
    %c0_23 = arith.constant 0 : index
    %c0_24 = arith.constant 0 : index
    %27 = vector.load %arg10[%c0_23, %c0_24] : memref<104x4xf32, #tpu.memory_space<vmem>>, vector<104x4xf32>
    tpu.vector_store %arg10[%c0_23, %c0_24], %26 {strides = array<i32>} : memref<104x4xf32, #tpu.memory_space<vmem>>, vector<104x4xf32>,
    return
  }
  func.func @transform_0(%arg0: i32) -> (i32, i32) {
    %c0_i32 = arith.constant 0 : i32
    %c0_i32_0 = arith.constant 0 : i32
    return %arg0, %c0_i32 : i32, i32
  }
  func.func @transform_1(%arg0: i32) -> (i32, i32) {
    %c0_i32 = arith.constant 0 : i32
    %c0_i32_0 = arith.constant 0 : i32
    %c0_i32_1 = arith.constant 0 : i32
    return %c0_i32, %c0_i32_0 : i32, i32
  }
  func.func @transform_2(%arg0: i32) -> (i32, i32) {
    %c0_i32 = arith.constant 0 : i32
    %c0_i32_0 = arith.constant 0 : i32
    %c0_i32_1 = arith.constant 0 : i32
    return %c0_i32, %c0_i32_0 : i32, i32
  }
  func.func @transform_3(%arg0: i32) -> (i32, i32) {
    %c0_i32 = arith.constant 0 : i32
    %c0_i32_0 = arith.constant 0 : i32
    %c0_i32_1 = arith.constant 0 : i32
    return %c0_i32, %c0_i32_0 : i32, i32
  }
  func.func @transform_4(%arg0: i32) -> (i32, i32) {
    %c0_i32 = arith.constant 0 : i32
    %c0_i32_0 = arith.constant 0 : i32
    %c0_i32_1 = arith.constant 0 : i32
    return %c0_i32, %c0_i32_0 : i32, i32
  }
  func.func @transform_5(%arg0: i32) -> (i32, i32) {
    %c0_i32 = arith.constant 0 : i32
    %c0_i32_0 = arith.constant 0 : i32
    %c0_i32_1 = arith.constant 0 : i32
    return %c0_i32, %c0_i32_0 : i32, i32
  }
  func.func @transform_6(%arg0: i32) -> (i32, i32) {
    %c0_i32 = arith.constant 0 : i32
    %c0_i32_0 = arith.constant 0 : i32
    %c0_i32_1 = arith.constant 0 : i32
    return %c0_i32, %c0_i32_0 : i32, i32
  }
  func.func @transform_7(%arg0: i32) -> (i32, i32) {
    %c0_i32 = arith.constant 0 : i32
    %c0_i32_0 = arith.constant 0 : i32
    %c0_i32_1 = arith.constant 0 : i32
    return %c0_i32, %c0_i32_0 : i32, i32
  }
  func.func @transform_8(%arg0: i32) -> (i32, i32) {
    %c0_i32 = arith.constant 0 : i32
    %c0_i32_0 = arith.constant 0 : i32
    %c0_i32_1 = arith.constant 0 : i32
    return %c0_i32, %c0_i32_0 : i32, i32
  }
  func.func @transform_9(%arg0: i32) -> (i32, i32) {
    %c0_i32 = arith.constant 0 : i32
    %c0_i32_0 = arith.constant 0 : i32
    return %arg0, %c0_i32 : i32, i32
  }
}

</mosaic_0001>

<llo_original>
// kernel: mlp_forward.1
$region0: #{mlp_forward.1}
  #allocation0 [shape = 'u32[]', space=smem, size = 0x4, offset = 0x4, fixed_abs, tag = 'smem constant byte address 0x4 - core index']
  #allocation1 [shape = 'u32[144,128]{1,0:T(1,128)}', space=vmem, size = 0x12000, scoped, tag = 'internal scratch']
  %s0 = inlined_call_operand.vmem [shape: f32[208,16], index: 0, kind: input, shape index: {}]
  %s1 = inlined_call_operand.vmem [shape: f32[16,32], index: 1, kind: input, shape index: {}]
  %s2 = inlined_call_operand.vmem [shape: f32[1,32], index: 2, kind: input, shape index: {}]
  %s3 = inlined_call_operand.vmem [shape: f32[32,32], index: 3, kind: input, shape index: {}]
  %s4 = inlined_call_operand.vmem [shape: f32[1,32], index: 4, kind: input, shape index: {}]
  %s5 = inlined_call_operand.vmem [shape: f32[32,32], index: 5, kind: input, shape index: {}]
  %s6 = inlined_call_operand.vmem [shape: f32[1,32], index: 6, kind: input, shape index: {}]
  %s7 = inlined_call_operand.vmem [shape: f32[32,4], index: 7, kind: input, shape index: {}]
  %s8 = inlined_call_operand.vmem [shape: f32[1,4], index: 8, kind: input, shape index: {}]
  %s9 = inlined_call_operand.vmem [shape: f32[208,4], index: 9, kind: output, shape index: {}]
  %s10 = sld [smem:[#allocation0]]
  $region69: #{mlp_forward.1} parent=0
    _
  %s12 = ssub.s32 1, %s10
  %s13 = scalar_select 0, %s12, %s10
  loop: start=0, step=1, limit=4
  $region2: #{mlp_forward.1} parent=0 // loop_pre_header
    _
  $region3: #{mlp_forward.1} parent=0 // loop_header
    %s15 = sphi 0, %s19
    %p16 = scmp.ge.s32.totalorder %s15, 4
    %s25 = sphi 0, %s27
    %s28 = sphi 0, %s25
    %s29 = sphi 0, %s28
    %s45 = sphi 0, %s29
    %s49 = sphi 0, %s49
    %s51 = sphi 0, %s49
    %s52 = sphi 0, %s51
    %s66 = sphi 0, %s52
    %s70 = sphi 0, %s70
    %s72 = sphi 0, %s70
    %s73 = sphi 0, %s72
    %s87 = sphi 0, %s73
    %s91 = sphi 0, %s91
    %s93 = sphi 0, %s91
    %s94 = sphi 0, %s93
    %s108 = sphi 0, %s94
    %s112 = sphi 0, %s112
    %s114 = sphi 0, %s112
    %s115 = sphi 0, %s114
    %s129 = sphi 0, %s115
    %s133 = sphi 0, %s133
    %s135 = sphi 0, %s133
    %s136 = sphi 0, %s135
    %s150 = sphi 0, %s136
    %s154 = sphi 0, %s154
    %s156 = sphi 0, %s154
    %s157 = sphi 0, %s156
    %s171 = sphi 0, %s157
    %s175 = sphi 0, %s175
    %s177 = sphi 0, %s175
    %s178 = sphi 0, %s177
    %s192 = sphi 0, %s178
    %s196 = sphi 0, %s196
    %s198 = sphi 0, %s196
    %s199 = sphi 0, %s198
    %s213 = sphi 0, %s199
    %s219 = sphi 0, %s221
    %s222 = sphi 0, %s219
    %s223 = sphi 0, %s222
    %s239 = sphi 0, %s223
  $region4: #{mlp_forward.1} parent=0 // loop_header_branch
    %18 = sbr.rel (%p16) target = $region8
  $region5: #{mlp_forward.1} parent=0 // loop_body
    %s20 = ssub.s32 %s15, 1
    %s21 = ssub.s32 %s15, 2
    %s22 = sadd.s32 %s15, 1
    %s23 = ssub.s32 %s15, %s22
    %p24 = scmp.eq.s32.totalorder %s23, 0
    %s26 = sadd.s32 %s25, 1
    %s27 = scalar_select %p24, %s25, %s26
    %p30 = pneg %p24
    %p31 = scmp.eq.s32.totalorder %s15, 1
    %p32 = por %p30, %p31
    %p33 = scmp.ne.s32.totalorder %s25, %s28
    %p34 = scmp.eq.s32.totalorder %s15, 0
    %p35 = por %p33, %p34
    %p36 = scmp.ne.s32.totalorder %s25, %s28
    %p37 = scmp.eq.s32.totalorder %s20, 1
    %p38 = por %p36, %p37
    %p39 = scmp.ne.s32.totalorder %s28, %s29
    %p40 = scmp.eq.s32.totalorder %s20, 0
    %p41 = por %p39, %p40
    %p42 = scmp.ne.s32.totalorder %s28, %s29
    %p43 = scmp.eq.s32.totalorder %s21, 1
    %p44 = por %p42, %p43
    %p46 = scmp.ne.s32.totalorder %s29, %s45
    %p47 = scmp.eq.s32.totalorder %s21, 0
    %p48 = por %p46, %p47
    %s50 = sadd.s32 %s49, 1
    %p53 = scmp.eq.s32.totalorder %s15, 1
    %p54 = scmp.ne.s32.totalorder %s49, %s51
    %p55 = scmp.eq.s32.totalorder %s15, 0
    %p56 = por %p54, %p55
    %p57 = scmp.ne.s32.totalorder %s49, %s51
    %p58 = scmp.eq.s32.totalorder %s20, 1
    %p59 = por %p57, %p58
    %p60 = scmp.ne.s32.totalorder %s51, %s52
    %p61 = scmp.eq.s32.totalorder %s20, 0
    %p62 = por %p60, %p61
    %p63 = scmp.ne.s32.totalorder %s51, %s52
    %p64 = scmp.eq.s32.totalorder %s21, 1
    %p65 = por %p63, %p64
    %p67 = scmp.ne.s32.totalorder %s52, %s66
    %p68 = scmp.eq.s32.totalorder %s21, 0
    %p69 = por %p67, %p68
    %s71 = sadd.s32 %s70, 1
    %p74 = scmp.eq.s32.totalorder %s15, 1
    %p75 = scmp.ne.s32.totalorder %s70, %s72
    %p76 = scmp.eq.s32.totalorder %s15, 0
    %p77 = por %p75, %p76
    %p78 = scmp.ne.s32.totalorder %s70, %s72
    %p79 = scmp.eq.s32.totalorder %s20, 1
    %p80 = por %p78, %p79
    %p81 = scmp.ne.s32.totalorder %s72, %s73
    %p82 = scmp.eq.s32.totalorder %s20, 0
    %p83 = por %p81, %p82
    %p84 = scmp.ne.s32.totalorder %s72, %s73
    %p85 = scmp.eq.s32.totalorder %s21, 1
    %p86 = por %p84, %p85
    %p88 = scmp.ne.s32.totalorder %s73, %s87
    %p89 = scmp.eq.s32.totalorder %s21, 0
    %p90 = por %p88, %p89
    %s92 = sadd.s32 %s91, 1
    %p95 = scmp.eq.s32.totalorder %s15, 1
    %p96 = scmp.ne.s32.totalorder %s91, %s93
    %p97 = scmp.eq.s32.totalorder %s15, 0
    %p98 = por %p96, %p97
    %p99 = scmp.ne.s32.totalorder %s91, %s93
    %p100 = scmp.eq.s32.totalorder %s20, 1
    %p101 = por %p99, %p100
    %p102 = scmp.ne.s32.totalorder %s93, %s94
    %p103 = scmp.eq.s32.totalorder %s20, 0
    %p104 = por %p102, %p103
    %p105 = scmp.ne.s32.totalorder %s93, %s94
    %p106 = scmp.eq.s32.totalorder %s21, 1
    %p107 = por %p105, %p106
    %p109 = scmp.ne.s32.totalorder %s94, %s108
    %p110 = scmp.eq.s32.totalorder %s21, 0
    %p111 = por %p109, %p110
    %s113 = sadd.s32 %s112, 1
    %p116 = scmp.eq.s32.totalorder %s15, 1
    %p117 = scmp.ne.s32.totalorder %s112, %s114
    %p118 = scmp.eq.s32.totalorder %s15, 0
    %p119 = por %p117, %p118
    %p120 = scmp.ne.s32.totalorder %s112, %s114
    %p121 = scmp.eq.s32.totalorder %s20, 1
    %p122 = por %p120, %p121
    %p123 = scmp.ne.s32.totalorder %s114, %s115
    %p124 = scmp.eq.s32.totalorder %s20, 0
    %p125 = por %p123, %p124
    %p126 = scmp.ne.s32.totalorder %s114, %s115
    %p127 = scmp.eq.s32.totalorder %s21, 1
    %p128 = por %p126, %p127
    %p130 = scmp.ne.s32.totalorder %s115, %s129
    %p131 = scmp.eq.s32.totalorder %s21, 0
    %p132 = por %p130, %p131
    %s134 = sadd.s32 %s133, 1
    %p137 = scmp.eq.s32.totalorder %s15, 1
    %p138 = scmp.ne.s32.totalorder %s133, %s135
    %p139 = scmp.eq.s32.totalorder %s15, 0
    %p140 = por %p138, %p139
    %p141 = scmp.ne.s32.totalorder %s133, %s135
    %p142 = scmp.eq.s32.totalorder %s20, 1
    %p143 = por %p141, %p142
    %p144 = scmp.ne.s32.totalorder %s135, %s136
    %p145 = scmp.eq.s32.totalorder %s20, 0
    %p146 = por %p144, %p145
    %p147 = scmp.ne.s32.totalorder %s135, %s136
    %p148 = scmp.eq.s32.totalorder %s21, 1
    %p149 = por %p147, %p148
    %p151 = scmp.ne.s32.totalorder %s136, %s150
    %p152 = scmp.eq.s32.totalorder %s21, 0
    %p153 = por %p151, %p152
    %s155 = sadd.s32 %s154, 1
    %p158 = scmp.eq.s32.totalorder %s15, 1
    %p159 = scmp.ne.s32.totalorder %s154, %s156
    %p160 = scmp.eq.s32.totalorder %s15, 0
    %p161 = por %p159, %p160
    %p162 = scmp.ne.s32.totalorder %s154, %s156
    %p163 = scmp.eq.s32.totalorder %s20, 1
    %p164 = por %p162, %p163
    %p165 = scmp.ne.s32.totalorder %s156, %s157
    %p166 = scmp.eq.s32.totalorder %s20, 0
    %p167 = por %p165, %p166
    %p168 = scmp.ne.s32.totalorder %s156, %s157
    %p169 = scmp.eq.s32.totalorder %s21, 1
    %p170 = por %p168, %p169
    %p172 = scmp.ne.s32.totalorder %s157, %s171
    %p173 = scmp.eq.s32.totalorder %s21, 0
    %p174 = por %p172, %p173
    %s176 = sadd.s32 %s175, 1
    %p179 = scmp.eq.s32.totalorder %s15, 1
    %p180 = scmp.ne.s32.totalorder %s175, %s177
    %p181 = scmp.eq.s32.totalorder %s15, 0
    %p182 = por %p180, %p181
    %p183 = scmp.ne.s32.totalorder %s175, %s177
    %p184 = scmp.eq.s32.totalorder %s20, 1
    %p185 = por %p183, %p184
    %p186 = scmp.ne.s32.totalorder %s177, %s178
    %p187 = scmp.eq.s32.totalorder %s20, 0
    %p188 = por %p186, %p187
    %p189 = scmp.ne.s32.totalorder %s177, %s178
    %p190 = scmp.eq.s32.totalorder %s21, 1
    %p191 = por %p189, %p190
    %p193 = scmp.ne.s32.totalorder %s178, %s192
    %p194 = scmp.eq.s32.totalorder %s21, 0
    %p195 = por %p193, %p194
    %s197 = sadd.s32 %s196, 1
    %p200 = scmp.eq.s32.totalorder %s15, 1
    %p201 = scmp.ne.s32.totalorder %s196, %s198
    %p202 = scmp.eq.s32.totalorder %s15, 0
    %p203 = por %p201, %p202
    %p204 = scmp.ne.s32.totalorder %s196, %s198
    %p205 = scmp.eq.s32.totalorder %s20, 1
    %p206 = por %p204, %p205
    %p207 = scmp.ne.s32.totalorder %s198, %s199
    %p208 = scmp.eq.s32.totalorder %s20, 0
    %p209 = por %p207, %p208
    %p210 = scmp.ne.s32.totalorder %s198, %s199
    %p211 = scmp.eq.s32.totalorder %s21, 1
    %p212 = por %p210, %p211
    %p214 = scmp.ne.s32.totalorder %s199, %s213
    %p215 = scmp.eq.s32.totalorder %s21, 0
    %p216 = por %p214, %p215
    %s217 = ssub.s32 %s15, %s22
    %p218 = scmp.eq.s32.totalorder %s217, 0
    %s220 = sadd.s32 %s219, 1
    %s221 = scalar_select %p218, %s219, %s220
    %p224 = pneg %p218
    %p225 = scmp.eq.s32.totalorder %s15, 1
    %p226 = por %p224, %p225
    %p227 = scmp.ne.s32.totalorder %s219, %s222
    %p228 = scmp.eq.s32.totalorder %s15, 0
    %p229 = por %p227, %p228
    %p230 = scmp.ne.s32.totalorder %s219, %s222
    %p231 = scmp.eq.s32.totalorder %s20, 1
    %p232 = por %p230, %p231
    %p233 = scmp.ne.s32.totalorder %s222, %s223
    %p234 = scmp.eq.s32.totalorder %s20, 0
    %p235 = por %p233, %p234
    %p236 = scmp.ne.s32.totalorder %s222, %s223
    %p237 = scmp.eq.s32.totalorder %s21, 1
    %p238 = por %p236, %p237
    %p240 = scmp.ne.s32.totalorder %s223, %s239
    %p241 = scmp.eq.s32.totalorder %s21, 0
    %p242 = por %p240, %p241
    %p243 = scmp.le.s32.totalorder 1, %s15
    %p244 = scmp.lt.s32.totalorder %s15, 3
    %p245 = pnand %p243, %p244
    %p246 = pneg %p245
    // Predicated region
    $region9: #{mlp_forward.1} parent=5 // pred_check
      _
    $region10: #{mlp_forward.1} parent=5 // pred_check_branch
      %248 = sbr.rel (%p245) target = $region12
    $region11: #{mlp_forward.1} parent=5 // pred_region
      %s249 = ssub.s32 %s15, 1
      // Predicated region
      $region13: #{mlp_forward.1} parent=11 // pred_check
        %p250 = pneg %p62
      $region14: #{mlp_forward.1} parent=11 // pred_check_branch
        %252 = sbr.rel (%p250) target = $region16
      $region15: #{mlp_forward.1} parent=11 // pred_region
        _
      $region16: #{mlp_forward.1} parent=11 // pred_fallthru
        _
      // Predicated region
      $region17: #{mlp_forward.1} parent=11 // pred_check
        %p253 = pneg %p83
      $region18: #{mlp_forward.1} parent=11 // pred_check_branch
        %255 = sbr.rel (%p253) target = $region20
      $region19: #{mlp_forward.1} parent=11 // pred_region
        _
      $region20: #{mlp_forward.1} parent=11 // pred_fallthru
        _
      // Predicated region
      $region21: #{mlp_forward.1} parent=11 // pred_check
        %p256 = pneg %p104
      $region22: #{mlp_forward.1} parent=11 // pred_check_branch
        %258 = sbr.rel (%p256) target = $region24
      $region23: #{mlp_forward.1} parent=11 // pred_region
        _
      $region24: #{mlp_forward.1} parent=11 // pred_fallthru
        _
      // Predicated region
      $region25: #{mlp_forward.1} parent=11 // pred_check
        %p259 = pneg %p125
      $region26: #{mlp_forward.1} parent=11 // pred_check_branch
        %261 = sbr.rel (%p259) target = $region28
      $region27: #{mlp_forward.1} parent=11 // pred_region
        _
      $region28: #{mlp_forward.1} parent=11 // pred_fallthru
        _
      // Predicated region
      $region29: #{mlp_forward.1} parent=11 // pred_check
        %p262 = pneg %p146
      $region30: #{mlp_forward.1} parent=11 // pred_check_branch
        %264 = sbr.rel (%p262) target = $region32
      $region31: #{mlp_forward.1} parent=11 // pred_region
        _
      $region32: #{mlp_forward.1} parent=11 // pred_fallthru
        _
      // Predicated region
      $region33: #{mlp_forward.1} parent=11 // pred_check
        %p265 = pneg %p167
      $region34: #{mlp_forward.1} parent=11 // pred_check_branch
        %267 = sbr.rel (%p265) target = $region36
      $region35: #{mlp_forward.1} parent=11 // pred_region
        _
      $region36: #{mlp_forward.1} parent=11 // pred_fallthru
        _
      // Predicated region
      $region37: #{mlp_forward.1} parent=11 // pred_check
        %p268 = pneg %p188
      $region38: #{mlp_forward.1} parent=11 // pred_check_branch
        %270 = sbr.rel (%p268) target = $region40
      $region39: #{mlp_forward.1} parent=11 // pred_region
        _
      $region40: #{mlp_forward.1} parent=11 // pred_fallthru
        _
      // Predicated region
      $region41: #{mlp_forward.1} parent=11 // pred_check
        %p271 = pneg %p209
      $region42: #{mlp_forward.1} parent=11 // pred_check_branch
        %273 = sbr.rel (%p271) target = $region44
      $region43: #{mlp_forward.1} parent=11 // pred_region
        _
      $region44: #{mlp_forward.1} parent=11 // pred_fallthru
        _
    $region12: #{mlp_forward.1} parent=5 // pred_fallthru
      _
    %p274 = scmp.lt.s32.totalorder %s15, 2
    // Predicated region
    $region45: #{mlp_forward.1} parent=5 // pred_check
      %p275 = pneg %p274
    $region46: #{mlp_forward.1} parent=5 // pred_check_branch
      %277 = sbr.rel (%p275) target = $region48
    $region47: #{mlp_forward.1} parent=5 // pred_region
      // Predicated region
      $region49: #{mlp_forward.1} parent=47 // pred_check
        %p278 = pneg %p35
      $region50: #{mlp_forward.1} parent=47 // pred_check_branch
        %280 = sbr.rel (%p278) target = $region52
      $region51: #{mlp_forward.1} parent=47 // pred_region
        %s281 = smul.u32 13, %s15
        %p282 = scmp.lt.s32.totalorder %s281, 25
        %s283 = scalar_select %p282, %s281, 25
        %s284 = smul.addr %s283, 8
        %s285 = scalar_lea.vmem %s0, %s284
        %s286 = smul.u32 13, %s15
      $region52: #{mlp_forward.1} parent=47 // pred_fallthru
        _
    $region48: #{mlp_forward.1} parent=5 // pred_fallthru
      _
    %p287 = scmp.le.s32.totalorder 1, %s15
    %p288 = scmp.lt.s32.totalorder %s15, 3
    %p289 = pnand %p287, %p288
    %p290 = pneg %p289
    // Predicated region
    $region53: #{mlp_forward.1} parent=5 // pred_check
      _
    $region54: #{mlp_forward.1} parent=5 // pred_check_branch
      %292 = sbr.rel (%p289) target = $region56
    $region55: #{mlp_forward.1} parent=5 // pred_region
      %s293 = ssub.s32 %s15, 1
      %s294 = smul.u32 13, %s20
      %p295 = scmp.lt.s32.totalorder %s294, 25
      %s296 = scalar_select %p295, %s294, 25
      %s297 = smul.addr %s296, 8
      %s298 = scalar_lea.vmem %s0, %s297
      %p299 = pneg %p41
      %p300 = pneg %p38
      %p301 = pneg %p62
      %p302 = pneg %p59
      %p303 = pneg %p83
      %p304 = pneg %p80
      %p305 = pneg %p104
      %p306 = pneg %p101
      %p307 = pneg %p125
      %p308 = pneg %p122
      %p309 = pneg %p146
      %p310 = pneg %p143
      %p311 = pneg %p167
      %p312 = pneg %p164
      %p313 = pneg %p188
      %p314 = pneg %p185
      %p315 = pneg %p209
      %p316 = pneg %p206
      %p317 = pneg %p235
      %p318 = pneg %p232
      %s319 = smul.u32 13, %s20
      %p320 = scmp.lt.s32.totalorder %s319, 25
      %s321 = scalar_select %p320, %s319, 25
      %s322 = smul.addr %s321, 8
      %s323 = scalar_lea.vmem %s9, %s322
      %s324 = smul.u32 13, %s20
      %p325 = scmp.lt.s32.totalorder %s324, 25
      %s326 = scalar_select %p325, %s324, 25
      %s327 = smul.addr %s326, 8
      %s328 = scalar_lea.vmem %s0, %s327
      %s329 = smul.u32 13, %s20
      %s330 = smul.u32 13, %s20
      %p331 = scmp.lt.s32.totalorder %s330, 25
      %s332 = scalar_select %p331, %s330, 25
      %s333 = smul.addr %s332, 8
      %s334 = scalar_lea.vmem %s9, %s333
      %s335 = smul.u32 13, %s20
      %v336 = vld [vmem:[%s328] sm:$0xff]
      %v337 = vld [vmem:[%s328 + $0x8] sm:$0xff]
      %v338 = vld [vmem:[%s328 + $0x10] sm:$0xff]
      %v339 = vld [vmem:[%s328 + $0x18] sm:$0xff]
      %v340 = vld [vmem:[%s328 + $0x20] sm:$0xff]
      %v341 = vld [vmem:[%s328 + $0x28] sm:$0xff]
      %v342 = vld [vmem:[%s328 + $0x30] sm:$0xff]
      %v343 = vld [vmem:[%s328 + $0x38] sm:$0xff]
      %v344 = vld [vmem:[%s328 + $0x40] sm:$0xff]
      %v345 = vld [vmem:[%s328 + $0x48] sm:$0xff]
      %v346 = vld [vmem:[%s328 + $0x50] sm:$0xff]
      %v347 = vld [vmem:[%s328 + $0x58] sm:$0xff]
      %v348 = vld [vmem:[%s328 + $0x60] sm:$0xff]
      %v349 = vld [vmem:[%s1] sm:$0xff]
      %v350 = vld [vmem:[%s1 + $0x8] sm:$0xff]
      %v351 = vld [vmem:[%s2] sm:$0x1]
      %v353 = vlaneseq
      %v354 = vshrl.u32 %v353, 7
      %v355 = vsub.s32 0, %v354
      %v356 = vrot.slane %v351, %v355
      %vm358 = vcmask 130048
      %v360 = vsel %vm358, %v336, 0
      %v363 = vsel %vm358, %v337, 0
      %v366 = vsel %vm358, %v338, 0
      %v369 = vsel %vm358, %v339, 0
      %v372 = vsel %vm358, %v340, 0
      %v375 = vsel %vm358, %v341, 0
      %v378 = vsel %vm358, %v342, 0
      %v381 = vsel %vm358, %v343, 0
      %v384 = vsel %vm358, %v344, 0
      %v387 = vsel %vm358, %v345, 0
      %v390 = vsel %vm358, %v346, 0
      %v393 = vsel %vm358, %v347, 0
      %v396 = vsel %vm358, %v348, 0
      %398 = vmatprep.subr.mxu0 0.0
      %399 = vmatpush1.msra.mxu0 %v349
      %400 = vmatprep.subr.mxu0 0.0
      %401 = vmatpush1.msra.mxu0 %v350
      %402 = vmatprep.subr.mxu0 0.0
      %403 = vmatpush1.msra.mxu0 0.0
      %404 = vmatprep.subr.mxu0 0.0
      %405 = vmatpush1.msra.mxu0 0.0
      %406 = vmatprep.subr.mxu0 0.0
      %407 = vmatpush1.msra.mxu0 0.0
      %408 = vmatprep.subr.mxu0 0.0
      %409 = vmatpush1.msra.mxu0 0.0
      %410 = vmatprep.subr.mxu0 0.0
      %411 = vmatpush1.msra.mxu0 0.0
      %412 = vmatprep.subr.mxu0 0.0
      %413 = vmatpush1.msra.mxu0 0.0
      %414 = vmatprep.subr.mxu0 0.0
      %415 = vmatpush1.msra.mxu0 0.0
      %416 = vmatprep.subr.mxu0 0.0
      %417 = vmatpush1.msra.mxu0 0.0
      %418 = vmatprep.subr.mxu0 0.0
      %419 = vmatpush1.msra.mxu0 0.0
      %420 = vmatprep.subr.mxu0 0.0
      %421 = vmatpush1.msra.mxu0 0.0
      %422 = vmatprep.subr.mxu0 0.0
      %423 = vmatpush1.msra.mxu0 0.0
      %424 = vmatprep.subr.mxu0 0.0
      %425 = vmatpush1.msra.mxu0 0.0
      %426 = vmatprep.subr.mxu0 0.0
      %427 = vmatpush1.msra.mxu0 0.0
      %428 = vmatprep.subr.mxu0 0.0
      %429 = vmatpush1.msra.mxu0 0.0
      %430 = vmatprep.subr.mxu0 0.0
      %431 = vmatpush1.msra.mxu0 0.0
      %432 = vmatprep.subr.mxu0 0.0
      %433 = vmatpush1.msra.mxu0 0.0
      %434 = vmatprep.subr.mxu0 0.0
      %435 = vmatpush1.msra.mxu0 0.0
      %436 = vmatprep.subr.mxu0 0.0
      %437 = vmatpush1.msra.mxu0 0.0
      %438 = vmatprep.subr.mxu0 0.0
      %439 = vmatpush1.msra.mxu0 0.0
      %440 = vmatprep.subr.mxu0 0.0
      %441 = vmatpush1.msra.mxu0 0.0
      %442 = vmatprep.subr.mxu0 0.0
      %443 = vmatpush1.msra.mxu0 0.0
      %444 = vmatprep.subr.mxu0 0.0
      %445 = vmatpush1.msra.mxu0 0.0
      %446 = vmatprep.subr.mxu0 0.0
      %447 = vmatpush1.msra.mxu0 0.0
      %448 = vmatprep.subr.mxu0 0.0
      %449 = vmatpush1.msra.mxu0 0.0
      %450 = vmatprep.subr.mxu0 0.0
      %451 = vmatpush1.msra.mxu0 0.0
      %452 = vmatprep.subr.mxu0 0.0
      %453 = vmatpush1.msra.mxu0 0.0
      %454 = vmatprep.subr.mxu0 0.0
      %455 = vmatpush1.msra.mxu0 0.0
      %456 = vmatprep.subr.mxu0 0.0
      %457 = vmatpush1.msra.mxu0 0.0
      %458 = vmatprep.subr.mxu0 0.0
      %459 = vmatpush1.msra.mxu0 0.0
      %460 = vmatprep.subr.mxu0 0.0
      %461 = vmatpush1.msra.mxu0 0.0
      %462 = vmatprep.mubr.f32.mxu0 0.0
      %463 = vmatmul.mubr.f32.gmra.mrb[0].mxu0 %v360
      %v464 = vpop.f32.mrb[0].mxu0
      %v465 = vadd.f32 %v356, %v464
      %v466 = vpop.f32.mrb[0].mxu0
      %467 = vmatprep.mubr.f32.mxu0 0.0
      %468 = vmatmul.mubr.f32.gmra.mrb[0].mxu0 %v363
      %v469 = vpop.f32.mrb[0].mxu0
      %v470 = vadd.f32 %v356, %v469
      %v471 = vpop.f32.mrb[0].mxu0
      %472 = vmatprep.mubr.f32.mxu0 0.0
      %473 = vmatmul.mubr.f32.gmra.mrb[0].mxu0 %v366
      %v474 = vpop.f32.mrb[0].mxu0
      %v475 = vadd.f32 %v356, %v474
      %v476 = vpop.f32.mrb[0].mxu0
      %477 = vmatprep.mubr.f32.mxu0 0.0
      %478 = vmatmul.mubr.f32.gmra.mrb[0].mxu0 %v369
      %v479 = vpop.f32.mrb[0].mxu0
      %v480 = vadd.f32 %v356, %v479
      %v481 = vpop.f32.mrb[0].mxu0
      %482 = vmatprep.mubr.f32.mxu0 0.0
      %483 = vmatmul.mubr.f32.gmra.mrb[0].mxu0 %v372
      %v484 = vpop.f32.mrb[0].mxu0
      %v485 = vadd.f32 %v356, %v484
      %v486 = vpop.f32.mrb[0].mxu0
      %487 = vmatprep.mubr.f32.mxu0 0.0
      %488 = vmatmul.mubr.f32.gmra.mrb[0].mxu0 %v375
      %v489 = vpop.f32.mrb[0].mxu0
      %v490 = vadd.f32 %v356, %v489
      %v491 = vpop.f32.mrb[0].mxu0
      %492 = vmatprep.mubr.f32.mxu0 0.0
      %493 = vmatmul.mubr.f32.gmra.mrb[0].mxu0 %v378
      %v494 = vpop.f32.mrb[0].mxu0
      %v495 = vadd.f32 %v356, %v494
      %v496 = vpop.f32.mrb[0].mxu0
      %497 = vmatprep.mubr.f32.mxu0 0.0
      %498 = vmatmul.mubr.f32.gmra.mrb[0].mxu0 %v381
      %v499 = vpop.f32.mrb[0].mxu0
      %v500 = vadd.f32 %v356, %v499
      %v501 = vpop.f32.mrb[0].mxu0
      %502 = vmatprep.mubr.f32.mxu0 0.0
      %503 = vmatmul.mubr.f32.gmra.mrb[0].mxu0 %v384
      %v504 = vpop.f32.mrb[0].mxu0
      %v505 = vadd.f32 %v356, %v504
      %v506 = vpop.f32.mrb[0].mxu0
      %507 = vmatprep.mubr.f32.mxu0 0.0
      %508 = vmatmul.mubr.f32.gmra.mrb[0].mxu0 %v387
      %v509 = vpop.f32.mrb[0].mxu0
      %v510 = vadd.f32 %v356, %v509
      %v511 = vpop.f32.mrb[0].mxu0
      %512 = vmatprep.mubr.f32.mxu0 0.0
      %513 = vmatmul.mubr.f32.gmra.mrb[0].mxu0 %v390
      %v514 = vpop.f32.mrb[0].mxu0
      %v515 = vadd.f32 %v356, %v514
      %v516 = vpop.f32.mrb[0].mxu0
      %517 = vmatprep.mubr.f32.mxu0 0.0
      %518 = vmatmul.mubr.f32.gmra.mrb[0].mxu0 %v393
      %v519 = vpop.f32.mrb[0].mxu0
      %v520 = vadd.f32 %v356, %v519
      %v521 = vpop.f32.mrb[0].mxu0
      %522 = vmatprep.mubr.f32.mxu0 0.0
      %523 = vmatmul.mubr.f32.gmra.mrb[0].mxu0 %v396
      %v524 = vpop.f32.mrb[0].mxu0
      %v525 = vadd.f32 %v356, %v524
      %v526 = vpop.f32.mrb[0].mxu0
      %527 = vdwg.mxu0
      %v528 = vmax.f32 %v465, 0.0
      %v529 = vmax.f32 %v470, 0.0
      %v530 = vmax.f32 %v475, 0.0
      %v531 = vmax.f32 %v480, 0.0
      %v532 = vmax.f32 %v485, 0.0
      %v533 = vmax.f32 %v490, 0.0
      %v534 = vmax.f32 %v495, 0.0
      %v535 = vmax.f32 %v500, 0.0
      %v536 = vmax.f32 %v505, 0.0
      %v537 = vmax.f32 %v510, 0.0
      %v538 = vmax.f32 %v515, 0.0
      %v539 = vmax.f32 %v520, 0.0
      %v540 = vmax.f32 %v525, 0.0
      %v541 = vld [vmem:[%s3] sm:$0xff]
      %v542 = vld [vmem:[%s3 + $0x8] sm:$0xff]
      %v543 = vld [vmem:[%s3 + $0x10] sm:$0xff]
      %v544 = vld [vmem:[%s3 + $0x18] sm:$0xff]
      %v545 = vld [vmem:[%s4] sm:$0x1]
      %v547 = vlaneseq
      %v548 = vshrl.u32 %v547, 7
      %v549 = vsub.s32 0, %v548
      %v550 = vrot.slane %v545, %v549
      %vm552 = vcmask 261120
      %v554 = vsel %vm552, %v528, 0
      %v557 = vsel %vm552, %v529, 0
      %v560 = vsel %vm552, %v530, 0
      %v563 = vsel %vm552, %v531, 0
      %v566 = vsel %vm552, %v532, 0
      %v569 = vsel %vm552, %v533, 0
      %v572 = vsel %vm552, %v534, 0
      %v575 = vsel %vm552, %v535, 0
      %v578 = vsel %vm552, %v536, 0
      %v581 = vsel %vm552, %v537, 0
      %v584 = vsel %vm552, %v538, 0
      %v587 = vsel %vm552, %v539, 0
      %v590 = vsel %vm552, %v540, 0
      %592 = vmatprep.subr.mxu0 0.0
      %593 = vmatpush1.msra.mxu0 %v541
      %594 = vmatprep.subr.mxu0 0.0
      %595 = vmatpush1.msra.mxu0 %v542
      %596 = vmatprep.subr.mxu0 0.0
      %597 = vmatpush1.msra.mxu0 %v543
      %598 = vmatprep.subr.mxu0 0.0
      %599 = vmatpush1.msra.mxu0 %v544
      %600 = vmatprep.subr.mxu0 0.0
      %601 = vmatpush1.msra.mxu0 0.0
      %602 = vmatprep.subr.mxu0 0.0
      %603 = vmatpush1.msra.mxu0 0.0
      %604 = vmatprep.subr.mxu0 0.0
      %605 = vmatpush1.msra.mxu0 0.0
      %606 = vmatprep.subr.mxu0 0.0
      %607 = vmatpush1.msra.mxu0 0.0
      %608 = vmatprep.subr.mxu0 0.0
      %609 = vmatpush1.msra.mxu0 0.0
      %610 = vmatprep.subr.mxu0 0.0
      %611 = vmatpush1.msra.mxu0 0.0
      %612 = vmatprep.subr.mxu0 0.0
      %613 = vmatpush1.msra.mxu0 0.0
      %614 = vmatprep.subr.mxu0 0.0
      %615 = vmatpush1.msra.mxu0 0.0
      %616 = vmatprep.subr.mxu0 0.0
      %617 = vmatpush1.msra.mxu0 0.0
      %618 = vmatprep.subr.mxu0 0.0
      %619 = vmatpush1.msra.mxu0 0.0
      %620 = vmatprep.subr.mxu0 0.0
      %621 = vmatpush1.msra.mxu0 0.0
      %622 = vmatprep.subr.mxu0 0.0
      %623 = vmatpush1.msra.mxu0 0.0
      %624 = vmatprep.subr.mxu0 0.0
      %625 = vmatpush1.msra.mxu0 0.0
      %626 = vmatprep.subr.mxu0 0.0
      %627 = vmatpush1.msra.mxu0 0.0
      %628 = vmatprep.subr.mxu0 0.0
      %629 = vmatpush1.msra.mxu0 0.0
      %630 = vmatprep.subr.mxu0 0.0
      %631 = vmatpush1.msra.mxu0 0.0
      %632 = vmatprep.subr.mxu0 0.0
      %633 = vmatpush1.msra.mxu0 0.0
      %634 = vmatprep.subr.mxu0 0.0
      %635 = vmatpush1.msra.mxu0 0.0
      %636 = vmatprep.subr.mxu0 0.0
      %637 = vmatpush1.msra.mxu0 0.0
      %638 = vmatprep.subr.mxu0 0.0
      %639 = vmatpush1.msra.mxu0 0.0
      %640 = vmatprep.subr.mxu0 0.0
      %641 = vmatpush1.msra.mxu0 0.0
      %642 = vmatprep.subr.mxu0 0.0
      %643 = vmatpush1.msra.mxu0 0.0
      %644 = vmatprep.subr.mxu0 0.0
      %645 = vmatpush1.msra.mxu0 0.0
      %646 = vmatprep.subr.mxu0 0.0
      %647 = vmatpush1.msra.mxu0 0.0
      %648 = vmatprep.subr.mxu0 0.0
      %649 = vmatpush1.msra.mxu0 0.0
      %650 = vmatprep.subr.mxu0 0.0
      %651 = vmatpush1.msra.mxu0 0.0
      %652 = vmatprep.subr.mxu0 0.0
      %653 = vmatpush1.msra.mxu0 0.0
      %654 = vmatprep.subr.mxu0 0.0
      %655 = vmatpush1.msra.mxu0 0.0
      %656 = vmatprep.mubr.f32.mxu0 0.0
      %657 = vmatmul.mubr.f32.gmra.mrb[0].mxu0 %v554
      %v658 = vpop.f32.mrb[0].mxu0
      %v659 = vadd.f32 %v550, %v658
      %v660 = vpop.f32.mrb[0].mxu0
      %661 = vmatprep.mubr.f32.mxu0 0.0
      %662 = vmatmul.mubr.f32.gmra.mrb[0].mxu0 %v557
      %v663 = vpop.f32.mrb[0].mxu0
      %v664 = vadd.f32 %v550, %v663
      %v665 = vpop.f32.mrb[0].mxu0
      %666 = vmatprep.mubr.f32.mxu0 0.0
      %667 = vmatmul.mubr.f32.gmra.mrb[0].mxu0 %v560
      %v668 = vpop.f32.mrb[0].mxu0
      %v669 = vadd.f32 %v550, %v668
      %v670 = vpop.f32.mrb[0].mxu0
      %671 = vmatprep.mubr.f32.mxu0 0.0
      %672 = vmatmul.mubr.f32.gmra.mrb[0].mxu0 %v563
      %v673 = vpop.f32.mrb[0].mxu0
      %v674 = vadd.f32 %v550, %v673
      %v675 = vpop.f32.mrb[0].mxu0
      %676 = vmatprep.mubr.f32.mxu0 0.0
      %677 = vmatmul.mubr.f32.gmra.mrb[0].mxu0 %v566
      %v678 = vpop.f32.mrb[0].mxu0
      %v679 = vadd.f32 %v550, %v678
      %v680 = vpop.f32.mrb[0].mxu0
      %681 = vmatprep.mubr.f32.mxu0 0.0
      %682 = vmatmul.mubr.f32.gmra.mrb[0].mxu0 %v569
      %v683 = vpop.f32.mrb[0].mxu0
      %v684 = vadd.f32 %v550, %v683
      %v685 = vpop.f32.mrb[0].mxu0
      %686 = vmatprep.mubr.f32.mxu0 0.0
      %687 = vmatmul.mubr.f32.gmra.mrb[0].mxu0 %v572
      %v688 = vpop.f32.mrb[0].mxu0
      %v689 = vadd.f32 %v550, %v688
      %v690 = vpop.f32.mrb[0].mxu0
      %691 = vmatprep.mubr.f32.mxu0 0.0
      %692 = vmatmul.mubr.f32.gmra.mrb[0].mxu0 %v575
      %v693 = vpop.f32.mrb[0].mxu0
      %v694 = vadd.f32 %v550, %v693
      %v695 = vpop.f32.mrb[0].mxu0
      %696 = vmatprep.mubr.f32.mxu0 0.0
      %697 = vmatmul.mubr.f32.gmra.mrb[0].mxu0 %v578
      %v698 = vpop.f32.mrb[0].mxu0
      %v699 = vadd.f32 %v550, %v698
      %v700 = vpop.f32.mrb[0].mxu0
      %701 = vmatprep.mubr.f32.mxu0 0.0
      %702 = vmatmul.mubr.f32.gmra.mrb[0].mxu0 %v581
      %v703 = vpop.f32.mrb[0].mxu0
      %v704 = vadd.f32 %v550, %v703
      %v705 = vpop.f32.mrb[0].mxu0
      %706 = vmatprep.mubr.f32.mxu0 0.0
      %707 = vmatmul.mubr.f32.gmra.mrb[0].mxu0 %v584
      %v708 = vpop.f32.mrb[0].mxu0
      %v709 = vadd.f32 %v550, %v708
      %v710 = vpop.f32.mrb[0].mxu0
      %711 = vmatprep.mubr.f32.mxu0 0.0
      %712 = vmatmul.mubr.f32.gmra.mrb[0].mxu0 %v587
      %v713 = vpop.f32.mrb[0].mxu0
      %v714 = vadd.f32 %v550, %v713
      %v715 = vpop.f32.mrb[0].mxu0
      %716 = vmatprep.mubr.f32.mxu0 0.0
      %717 = vmatmul.mubr.f32.gmra.mrb[0].mxu0 %v590
      %v718 = vpop.f32.mrb[0].mxu0
      %v719 = vadd.f32 %v550, %v718
      %v720 = vpop.f32.mrb[0].mxu0
      %721 = vdwg.mxu0
      %v722 = vmax.f32 %v659, 0.0
      %v723 = vmax.f32 %v664, 0.0
      %v724 = vmax.f32 %v669, 0.0
      %v725 = vmax.f32 %v674, 0.0
      %v726 = vmax.f32 %v679, 0.0
      %v727 = vmax.f32 %v684, 0.0
      %v728 = vmax.f32 %v689, 0.0
      %v729 = vmax.f32 %v694, 0.0
      %v730 = vmax.f32 %v699, 0.0
      %v731 = vmax.f32 %v704, 0.0
      %v732 = vmax.f32 %v709, 0.0
      %v733 = vmax.f32 %v714, 0.0
      %v734 = vmax.f32 %v719, 0.0
      %v735 = vld [vmem:[%s5] sm:$0xff]
      %v736 = vld [vmem:[%s5 + $0x8] sm:$0xff]
      %v737 = vld [vmem:[%s5 + $0x10] sm:$0xff]
      %v738 = vld [vmem:[%s5 + $0x18] sm:$0xff]
      %v739 = vld [vmem:[%s6] sm:$0x1]
      %v741 = vlaneseq
      %v742 = vshrl.u32 %v741, 7
      %v743 = vsub.s32 0, %v742
      %v744 = vrot.slane %v739, %v743
      %v747 = vsel %vm552, %v722, 0
      %v750 = vsel %vm552, %v723, 0
      %v753 = vsel %vm552, %v724, 0
      %v756 = vsel %vm552, %v725, 0
      %v759 = vsel %vm552, %v726, 0
      %v762 = vsel %vm552, %v727, 0
      %v765 = vsel %vm552, %v728, 0
      %v768 = vsel %vm552, %v729, 0
      %v771 = vsel %vm552, %v730, 0
      %v774 = vsel %vm552, %v731, 0
      %v777 = vsel %vm552, %v732, 0
      %v780 = vsel %vm552, %v733, 0
      %v783 = vsel %vm552, %v734, 0
      %785 = vmatprep.subr.mxu0 0.0
      %786 = vmatpush1.msra.mxu0 %v735
      %787 = vmatprep.subr.mxu0 0.0
      %788 = vmatpush1.msra.mxu0 %v736
      %789 = vmatprep.subr.mxu0 0.0
      %790 = vmatpush1.msra.mxu0 %v737
      %791 = vmatprep.subr.mxu0 0.0
      %792 = vmatpush1.msra.mxu0 %v738
      %793 = vmatprep.subr.mxu0 0.0
      %794 = vmatpush1.msra.mxu0 0.0
      %795 = vmatprep.subr.mxu0 0.0
      %796 = vmatpush1.msra.mxu0 0.0
      %797 = vmatprep.subr.mxu0 0.0
      %798 = vmatpush1.msra.mxu0 0.0
      %799 = vmatprep.subr.mxu0 0.0
      %800 = vmatpush1.msra.mxu0 0.0
      %801 = vmatprep.subr.mxu0 0.0
      %802 = vmatpush1.msra.mxu0 0.0
      %803 = vmatprep.subr.mxu0 0.0
      %804 = vmatpush1.msra.mxu0 0.0
      %805 = vmatprep.subr.mxu0 0.0
      %806 = vmatpush1.msra.mxu0 0.0
      %807 = vmatprep.subr.mxu0 0.0
      %808 = vmatpush1.msra.mxu0 0.0
      %809 = vmatprep.subr.mxu0 0.0
      %810 = vmatpush1.msra.mxu0 0.0
      %811 = vmatprep.subr.mxu0 0.0
      %812 = vmatpush1.msra.mxu0 0.0
      %813 = vmatprep.subr.mxu0 0.0
      %814 = vmatpush1.msra.mxu0 0.0
      %815 = vmatprep.subr.mxu0 0.0
      %816 = vmatpush1.msra.mxu0 0.0
      %817 = vmatprep.subr.mxu0 0.0
      %818 = vmatpush1.msra.mxu0 0.0
      %819 = vmatprep.subr.mxu0 0.0
      %820 = vmatpush1.msra.mxu0 0.0
      %821 = vmatprep.subr.mxu0 0.0
      %822 = vmatpush1.msra.mxu0 0.0
      %823 = vmatprep.subr.mxu0 0.0
      %824 = vmatpush1.msra.mxu0 0.0
      %825 = vmatprep.subr.mxu0 0.0
      %826 = vmatpush1.msra.mxu0 0.0
      %827 = vmatprep.subr.mxu0 0.0
      %828 = vmatpush1.msra.mxu0 0.0
      %829 = vmatprep.subr.mxu0 0.0
      %830 = vmatpush1.msra.mxu0 0.0
      %831 = vmatprep.subr.mxu0 0.0
      %832 = vmatpush1.msra.mxu0 0.0
      %833 = vmatprep.subr.mxu0 0.0
      %834 = vmatpush1.msra.mxu0 0.0
      %835 = vmatprep.subr.mxu0 0.0
      %836 = vmatpush1.msra.mxu0 0.0
      %837 = vmatprep.subr.mxu0 0.0
      %838 = vmatpush1.msra.mxu0 0.0
      %839 = vmatprep.subr.mxu0 0.0
      %840 = vmatpush1.msra.mxu0 0.0
      %841 = vmatprep.subr.mxu0 0.0
      %842 = vmatpush1.msra.mxu0 0.0
      %843 = vmatprep.subr.mxu0 0.0
      %844 = vmatpush1.msra.mxu0 0.0
      %845 = vmatprep.subr.mxu0 0.0
      %846 = vmatpush1.msra.mxu0 0.0
      %847 = vmatprep.subr.mxu0 0.0
      %848 = vmatpush1.msra.mxu0 0.0
      %849 = vmatprep.mubr.f32.mxu0 0.0
      %850 = vmatmul.mubr.f32.gmra.mrb[0].mxu0 %v747
      %v851 = vpop.f32.mrb[0].mxu0
      %v852 = vadd.f32 %v744, %v851
      %v853 = vpop.f32.mrb[0].mxu0
      %854 = vmatprep.mubr.f32.mxu0 0.0
      %855 = vmatmul.mubr.f32.gmra.mrb[0].mxu0 %v750
      %v856 = vpop.f32.mrb[0].mxu0
      %v857 = vadd.f32 %v744, %v856
      %v858 = vpop.f32.mrb[0].mxu0
      %859 = vmatprep.mubr.f32.mxu0 0.0
      %860 = vmatmul.mubr.f32.gmra.mrb[0].mxu0 %v753
      %v861 = vpop.f32.mrb[0].mxu0
      %v862 = vadd.f32 %v744, %v861
      %v863 = vpop.f32.mrb[0].mxu0
      %864 = vmatprep.mubr.f32.mxu0 0.0
      %865 = vmatmul.mubr.f32.gmra.mrb[0].mxu0 %v756
      %v866 = vpop.f32.mrb[0].mxu0
      %v867 = vadd.f32 %v744, %v866
      %v868 = vpop.f32.mrb[0].mxu0
      %869 = vmatprep.mubr.f32.mxu0 0.0
      %870 = vmatmul.mubr.f32.gmra.mrb[0].mxu0 %v759
      %v871 = vpop.f32.mrb[0].mxu0
      %v872 = vadd.f32 %v744, %v871
      %v873 = vpop.f32.mrb[0].mxu0
      %874 = vmatprep.mubr.f32.mxu0 0.0
      %875 = vmatmul.mubr.f32.gmra.mrb[0].mxu0 %v762
      %v876 = vpop.f32.mrb[0].mxu0
      %v877 = vadd.f32 %v744, %v876
      %v878 = vpop.f32.mrb[0].mxu0
      %879 = vmatprep.mubr.f32.mxu0 0.0
      %880 = vmatmul.mubr.f32.gmra.mrb[0].mxu0 %v765
      %v881 = vpop.f32.mrb[0].mxu0
      %v882 = vadd.f32 %v744, %v881
      %v883 = vpop.f32.mrb[0].mxu0
      %884 = vmatprep.mubr.f32.mxu0 0.0
      %885 = vmatmul.mubr.f32.gmra.mrb[0].mxu0 %v768
      %v886 = vpop.f32.mrb[0].mxu0
      %v887 = vadd.f32 %v744, %v886
      %v888 = vpop.f32.mrb[0].mxu0
      %889 = vmatprep.mubr.f32.mxu0 0.0
      %890 = vmatmul.mubr.f32.gmra.mrb[0].mxu0 %v771
      %v891 = vpop.f32.mrb[0].mxu0
      %v892 = vadd.f32 %v744, %v891
      %v893 = vpop.f32.mrb[0].mxu0
      %894 = vmatprep.mubr.f32.mxu0 0.0
      %895 = vmatmul.mubr.f32.gmra.mrb[0].mxu0 %v774
      %v896 = vpop.f32.mrb[0].mxu0
      %v897 = vadd.f32 %v744, %v896
      %v898 = vpop.f32.mrb[0].mxu0
      %899 = vmatprep.mubr.f32.mxu0 0.0
      %900 = vmatmul.mubr.f32.gmra.mrb[0].mxu0 %v777
      %v901 = vpop.f32.mrb[0].mxu0
      %v902 = vadd.f32 %v744, %v901
      %v903 = vpop.f32.mrb[0].mxu0
      %904 = vmatprep.mubr.f32.mxu0 0.0
      %905 = vmatmul.mubr.f32.gmra.mrb[0].mxu0 %v780
      %v906 = vpop.f32.mrb[0].mxu0
      %v907 = vadd.f32 %v744, %v906
      %v908 = vpop.f32.mrb[0].mxu0
      %909 = vmatprep.mubr.f32.mxu0 0.0
      %910 = vmatmul.mubr.f32.gmra.mrb[0].mxu0 %v783
      %v911 = vpop.f32.mrb[0].mxu0
      %v912 = vadd.f32 %v744, %v911
      %v913 = vpop.f32.mrb[0].mxu0
      %914 = vdwg.mxu0
      %v915 = vmax.f32 %v852, 0.0
      %v916 = vmax.f32 %v857, 0.0
      %v917 = vmax.f32 %v862, 0.0
      %v918 = vmax.f32 %v867, 0.0
      %v919 = vmax.f32 %v872, 0.0
      %v920 = vmax.f32 %v877, 0.0
      %v921 = vmax.f32 %v882, 0.0
      %v922 = vmax.f32 %v887, 0.0
      %v923 = vmax.f32 %v892, 0.0
      %v924 = vmax.f32 %v897, 0.0
      %v925 = vmax.f32 %v902, 0.0
      %v926 = vmax.f32 %v907, 0.0
      %v927 = vmax.f32 %v912, 0.0
      %v928 = vld [vmem:[%s7] sm:$0xff]
      %v929 = vld [vmem:[%s7 + $0x8] sm:$0xff]
      %v930 = vld [vmem:[%s7 + $0x10] sm:$0xff]
      %v931 = vld [vmem:[%s7 + $0x18] sm:$0xff]
      %v932 = vld [vmem:[%s8] sm:$0x1]
      %v934 = vlaneseq
      %v935 = vshrl.u32 %v934, 7
      %v936 = vsub.s32 0, %v935
      %v937 = vrot.slane %v932, %v936
      %v940 = vsel %vm552, %v915, 0
      %v943 = vsel %vm552, %v916, 0
      %v946 = vsel %vm552, %v917, 0
      %v949 = vsel %vm552, %v918, 0
      %v952 = vsel %vm552, %v919, 0
      %v955 = vsel %vm552, %v920, 0
      %v958 = vsel %vm552, %v921, 0
      %v961 = vsel %vm552, %v922, 0
      %v964 = vsel %vm552, %v923, 0
      %v967 = vsel %vm552, %v924, 0
      %v970 = vsel %vm552, %v925, 0
      %v973 = vsel %vm552, %v926, 0
      %v976 = vsel %vm552, %v927, 0
      %978 = vmatprep.subr.mxu0 0.0
      %979 = vmatpush1.msra.mxu0 %v928
      %980 = vmatprep.subr.mxu0 0.0
      %981 = vmatpush1.msra.mxu0 %v929
      %982 = vmatprep.subr.mxu0 0.0
      %983 = vmatpush1.msra.mxu0 %v930
      %984 = vmatprep.subr.mxu0 0.0
      %985 = vmatpush1.msra.mxu0 %v931
      %986 = vmatprep.subr.mxu0 0.0
      %987 = vmatpush1.msra.mxu0 0.0
      %988 = vmatprep.subr.mxu0 0.0
      %989 = vmatpush1.msra.mxu0 0.0
      %990 = vmatprep.subr.mxu0 0.0
      %991 = vmatpush1.msra.mxu0 0.0
      %992 = vmatprep.subr.mxu0 0.0
      %993 = vmatpush1.msra.mxu0 0.0
      %994 = vmatprep.subr.mxu0 0.0
      %995 = vmatpush1.msra.mxu0 0.0
      %996 = vmatprep.subr.mxu0 0.0
      %997 = vmatpush1.msra.mxu0 0.0
      %998 = vmatprep.subr.mxu0 0.0
      %999 = vmatpush1.msra.mxu0 0.0
      %1000 = vmatprep.subr.mxu0 0.0
      %1001 = vmatpush1.msra.mxu0 0.0
      %1002 = vmatprep.subr.mxu0 0.0
      %1003 = vmatpush1.msra.mxu0 0.0
      %1004 = vmatprep.subr.mxu0 0.0
      %1005 = vmatpush1.msra.mxu0 0.0
      %1006 = vmatprep.subr.mxu0 0.0
      %1007 = vmatpush1.msra.mxu0 0.0
      %1008 = vmatprep.subr.mxu0 0.0
      %1009 = vmatpush1.msra.mxu0 0.0
      %1010 = vmatprep.subr.mxu0 0.0
      %1011 = vmatpush1.msra.mxu0 0.0
      %1012 = vmatprep.subr.mxu0 0.0
      %1013 = vmatpush1.msra.mxu0 0.0
      %1014 = vmatprep.subr.mxu0 0.0
      %1015 = vmatpush1.msra.mxu0 0.0
      %1016 = vmatprep.subr.mxu0 0.0
      %1017 = vmatpush1.msra.mxu0 0.0
      %1018 = vmatprep.subr.mxu0 0.0
      %1019 = vmatpush1.msra.mxu0 0.0
      %1020 = vmatprep.subr.mxu0 0.0
      %1021 = vmatpush1.msra.mxu0 0.0
      %1022 = vmatprep.subr.mxu0 0.0
      %1023 = vmatpush1.msra.mxu0 0.0
      %1024 = vmatprep.subr.mxu0 0.0
      %1025 = vmatpush1.msra.mxu0 0.0
      %1026 = vmatprep.subr.mxu0 0.0
      %1027 = vmatpush1.msra.mxu0 0.0
      %1028 = vmatprep.subr.mxu0 0.0
      %1029 = vmatpush1.msra.mxu0 0.0
      %1030 = vmatprep.subr.mxu0 0.0
      %1031 = vmatpush1.msra.mxu0 0.0
      %1032 = vmatprep.subr.mxu0 0.0
      %1033 = vmatpush1.msra.mxu0 0.0
      %1034 = vmatprep.subr.mxu0 0.0
      %1035 = vmatpush1.msra.mxu0 0.0
      %1036 = vmatprep.subr.mxu0 0.0
      %1037 = vmatpush1.msra.mxu0 0.0
      %1038 = vmatprep.subr.mxu0 0.0
      %1039 = vmatpush1.msra.mxu0 0.0
      %1040 = vmatprep.subr.mxu0 0.0
      %1041 = vmatpush1.msra.mxu0 0.0
      %1042 = vmatprep.mubr.f32.mxu0 0.0
      %1043 = vmatmul.mubr.f32.gmra.mrb[0].mxu0 %v940
      %v1044 = vpop.f32.mrb[0].mxu0
      %v1045 = vadd.f32 %v937, %v1044
      %v1046 = vpop.f32.mrb[0].mxu0
      %1047 = vmatprep.mubr.f32.mxu0 0.0
      %1048 = vmatmul.mubr.f32.gmra.mrb[0].mxu0 %v943
      %v1049 = vpop.f32.mrb[0].mxu0
      %v1050 = vadd.f32 %v937, %v1049
      %v1051 = vpop.f32.mrb[0].mxu0
      %1052 = vmatprep.mubr.f32.mxu0 0.0
      %1053 = vmatmul.mubr.f32.gmra.mrb[0].mxu0 %v946
      %v1054 = vpop.f32.mrb[0].mxu0
      %v1055 = vadd.f32 %v937, %v1054
      %v1056 = vpop.f32.mrb[0].mxu0
      %1057 = vmatprep.mubr.f32.mxu0 0.0
      %1058 = vmatmul.mubr.f32.gmra.mrb[0].mxu0 %v949
      %v1059 = vpop.f32.mrb[0].mxu0
      %v1060 = vadd.f32 %v937, %v1059
      %v1061 = vpop.f32.mrb[0].mxu0
      %1062 = vmatprep.mubr.f32.mxu0 0.0
      %1063 = vmatmul.mubr.f32.gmra.mrb[0].mxu0 %v952
      %v1064 = vpop.f32.mrb[0].mxu0
      %v1065 = vadd.f32 %v937, %v1064
      %v1066 = vpop.f32.mrb[0].mxu0
      %1067 = vmatprep.mubr.f32.mxu0 0.0
      %1068 = vmatmul.mubr.f32.gmra.mrb[0].mxu0 %v955
      %v1069 = vpop.f32.mrb[0].mxu0
      %v1070 = vadd.f32 %v937, %v1069
      %v1071 = vpop.f32.mrb[0].mxu0
      %1072 = vmatprep.mubr.f32.mxu0 0.0
      %1073 = vmatmul.mubr.f32.gmra.mrb[0].mxu0 %v958
      %v1074 = vpop.f32.mrb[0].mxu0
      %v1075 = vadd.f32 %v937, %v1074
      %v1076 = vpop.f32.mrb[0].mxu0
      %1077 = vmatprep.mubr.f32.mxu0 0.0
      %1078 = vmatmul.mubr.f32.gmra.mrb[0].mxu0 %v961
      %v1079 = vpop.f32.mrb[0].mxu0
      %v1080 = vadd.f32 %v937, %v1079
      %v1081 = vpop.f32.mrb[0].mxu0
      %1082 = vmatprep.mubr.f32.mxu0 0.0
      %1083 = vmatmul.mubr.f32.gmra.mrb[0].mxu0 %v964
      %v1084 = vpop.f32.mrb[0].mxu0
      %v1085 = vadd.f32 %v937, %v1084
      %v1086 = vpop.f32.mrb[0].mxu0
      %1087 = vmatprep.mubr.f32.mxu0 0.0
      %1088 = vmatmul.mubr.f32.gmra.mrb[0].mxu0 %v967
      %v1089 = vpop.f32.mrb[0].mxu0
      %v1090 = vadd.f32 %v937, %v1089
      %v1091 = vpop.f32.mrb[0].mxu0
      %1092 = vmatprep.mubr.f32.mxu0 0.0
      %1093 = vmatmul.mubr.f32.gmra.mrb[0].mxu0 %v970
      %v1094 = vpop.f32.mrb[0].mxu0
      %v1095 = vadd.f32 %v937, %v1094
      %v1096 = vpop.f32.mrb[0].mxu0
      %1097 = vmatprep.mubr.f32.mxu0 0.0
      %1098 = vmatmul.mubr.f32.gmra.mrb[0].mxu0 %v973
      %v1099 = vpop.f32.mrb[0].mxu0
      %v1100 = vadd.f32 %v937, %v1099
      %v1101 = vpop.f32.mrb[0].mxu0
      %1102 = vmatprep.mubr.f32.mxu0 0.0
      %1103 = vmatmul.mubr.f32.gmra.mrb[0].mxu0 %v976
      %v1104 = vpop.f32.mrb[0].mxu0
      %v1105 = vadd.f32 %v937, %v1104
      %v1106 = vpop.f32.mrb[0].mxu0
      %1107 = vdwg.mxu0
      %vm1108 = vcmask 31744
      %1109 = vst.msk [vmem:[%s334] sm:$0xff] %vm1108, %v1045
      %1110 = vst.msk [vmem:[%s334 + $0x8] sm:$0xff] %vm1108, %v1050
      %1111 = vst.msk [vmem:[%s334 + $0x10] sm:$0xff] %vm1108, %v1055
      %1112 = vst.msk [vmem:[%s334 + $0x18] sm:$0xff] %vm1108, %v1060
      %1113 = vst.msk [vmem:[%s334 + $0x20] sm:$0xff] %vm1108, %v1065
      %1114 = vst.msk [vmem:[%s334 + $0x28] sm:$0xff] %vm1108, %v1070
      %1115 = vst.msk [vmem:[%s334 + $0x30] sm:$0xff] %vm1108, %v1075
      %1116 = vst.msk [vmem:[%s334 + $0x38] sm:$0xff] %vm1108, %v1080
      %1117 = vst.msk [vmem:[%s334 + $0x40] sm:$0xff] %vm1108, %v1085
      %1118 = vst.msk [vmem:[%s334 + $0x48] sm:$0xff] %vm1108, %v1090
      %1119 = vst.msk [vmem:[%s334 + $0x50] sm:$0xff] %vm1108, %v1095
      %1120 = vst.msk [vmem:[%s334 + $0x58] sm:$0xff] %vm1108, %v1100
      %1121 = vst.msk [vmem:[%s334 + $0x60] sm:$0xff] %vm1108, %v1105
      %s1122 = smul.u32 13, %s20
      %p1123 = scmp.lt.s32.totalorder %s1122, 25
      %s1124 = scalar_select %p1123, %s1122, 25
      %s1125 = smul.addr %s1124, 8
      %s1126 = scalar_lea.vmem %s9, %s1125
      // Predicated region
      $region57: #{mlp_forward.1} parent=55 // pred_check
        %p1127 = pneg %p232
      $region58: #{mlp_forward.1} parent=55 // pred_check_branch
        %1129 = sbr.rel (%p1127) target = $region60
      $region59: #{mlp_forward.1} parent=55 // pred_region
        %s1130 = smul.u32 13, %s20
      $region60: #{mlp_forward.1} parent=55 // pred_fallthru
        _
    $region56: #{mlp_forward.1} parent=5 // pred_fallthru
      _
    %p1131 = scmp.le.s32.totalorder 2, %s15
    // Predicated region
    $region61: #{mlp_forward.1} parent=5 // pred_check
      %p1132 = pneg %p1131
    $region62: #{mlp_forward.1} parent=5 // pred_check_branch
      %1134 = sbr.rel (%p1132) target = $region64
    $region63: #{mlp_forward.1} parent=5 // pred_region
      %s1135 = ssub.s32 %s15, 2
      // Predicated region
      $region65: #{mlp_forward.1} parent=63 // pred_check
        %p1136 = pneg %p238
      $region66: #{mlp_forward.1} parent=63 // pred_check_branch
        %1138 = sbr.rel (%p1136) target = $region68
      $region67: #{mlp_forward.1} parent=63 // pred_region
        %s1139 = smul.u32 13, %s21
        %p1140 = scmp.lt.s32.totalorder %s1139, 25
        %s1141 = scalar_select %p1140, %s1139, 25
        %s1142 = smul.addr %s1141, 8
        %s1143 = scalar_lea.vmem %s9, %s1142
      $region68: #{mlp_forward.1} parent=63 // pred_fallthru
        _
    $region64: #{mlp_forward.1} parent=5 // pred_fallthru
      _
  $region6: #{mlp_forward.1} parent=0 // loop_footer
    %s19 = sadd.s32 1, %s15
  $region7: #{mlp_forward.1} parent=0 // loop_footer_branch
    %14 = sbr.rel target = $region3
  $region8: #{mlp_forward.1} parent=0 // loop_exit
    _

</llo_original>
